<compile_context>
chip_gen: v5e
topology: v5e:2x2
jax: 0.10.0
libtpu: 0.0.40
codegen_flags: <defaults>
</compile_context>

<pallas_src>
import numpy as np

import jax
import jax.numpy as jnp
from jax.experimental import pallas as pl
from jax.experimental.pallas import tpu as pltpu

LANE = 128          # TPU lane width; all feature dims padded to this
N_LAYERS = 6
OUT_DIM = 50        # final layer width of the PyTorch module
_MAX_TILE = 2048    # largest row tile (in+out double buffers ~= 4 MiB VMEM)
_STEP_ROWS = 128    # ~0.35 us per grid step expressed as equivalent rows of work


def _round_up(n, m):
    return ((n + m - 1) // m) * m


def _choose_tile(batch):
    """Row-tile size for a (static) batch size, bounding dead-row padding."""
    if batch <= _MAX_TILE:
        # Single grid step, at most 7 rows of padding.
        return _round_up(max(batch, 8), 8)
    best_tb, best_cost = None, None
    for tb in (2048, 1024, 512):
        padded = _round_up(batch, tb)
        cost = padded + (padded // tb) * _STEP_ROWS   # padded work + step overhead
        if best_cost is None or cost < best_cost:
            best_tb, best_cost = tb, cost
    return best_tb


def _mlp_kernel(x_ref, w_ref, b_ref, out_ref):
    """x_ref: (TB,128)  w_ref: (6,128,128)  b_ref: (6,1,128)  out_ref: (TB,128).

    Weights/biases arrive pre-scaled by 0.5, so each layer computes
        h = 0.5 * tanh(x @ (0.5 W) + 0.5 b) + 0.5  ==  sigmoid(x @ W + b)
    using one EUP tanh and one scale+shift (no serial divide, no extra 0.5*y).
    """
    h = x_ref[...]                                    # f32 activations
    for i in range(N_LAYERS):                         # static unroll; i constant
        y = jnp.dot(h.astype(w_ref.dtype), w_ref[i],
                    preferred_element_type=jnp.float32) + b_ref[i]
        h = 0.5 * jnp.tanh(y) + 0.5
    out_ref[...] = h.astype(out_ref.dtype)


def pack_params(params, matmul_dtype=jnp.float32):
    """One-time packing of the 6 (W, b) pairs (W as (in, out)) into lane-padded
    stacks, with the sigmoid 0.5 folded in.

    Zero padding keeps the math exact: padded hidden lanes become
    0.5*tanh(0)+0.5 = 0.5 but only ever hit zero-padded weight rows of the
    next layer, contributing nothing.  Pass matmul_dtype=jnp.bfloat16 for
    MXU-native operands (~3x matmul rate, ~1e-3 relative error).
    """
    w_stack = np.zeros((N_LAYERS, LANE, LANE), np.float32)
    b_stack = np.zeros((N_LAYERS, 1, LANE), np.float32)
    for i, (w, b) in enumerate(params):
        w = np.asarray(w, np.float32)
        b = np.asarray(b, np.float32)
        w_stack[i, : w.shape[0], : w.shape[1]] = 0.5 * w
        b_stack[i, 0, : b.shape[0]] = 0.5 * b
    return jnp.asarray(w_stack, dtype=matmul_dtype), jnp.asarray(b_stack)


@jax.jit
def mlp_forward(x, w_stack, b_stack):
    """x: (B, 40) float.  w_stack/b_stack: outputs of pack_params (called once)."""
    B, in_dim = x.shape
    tb = _choose_tile(B)                              # static under jit
    b_padded = _round_up(B, tb)
    x_pad = jnp.pad(x.astype(jnp.float32),
                    ((0, b_padded - B), (0, LANE - in_dim)))

    out_pad = pl.pallas_call(
        _mlp_kernel,
        out_shape=jax.ShapeDtypeStruct((b_padded, LANE), jnp.float32),
        grid_spec=pltpu.PrefetchScalarGridSpec(
            num_scalar_prefetch=0,
            grid=(b_padded // tb,),
            in_specs=[
                pl.BlockSpec((tb, LANE), lambda i: (i, 0)),             # activations stream
                pl.BlockSpec((N_LAYERS, LANE, LANE), lambda i: (0, 0, 0)),  # weights resident
                pl.BlockSpec((N_LAYERS, 1, LANE), lambda i: (0, 0, 0)),     # biases resident
            ],
            out_specs=pl.BlockSpec((tb, LANE), lambda i: (i, 0)),
        ),
        compiler_params=pltpu.CompilerParams(
            # Row tiles are independent; lets megacore shard them across TCs.
            # TODO(synk): switch to pltpu.CORE_PARALLEL if v7x profiling shows
            # the row grid executing on a single TensorCore.
            dimension_semantics=("parallel",),
        ),
    )(x_pad, w_stack, b_stack)
    return out_pad[:B, :OUT_DIM]


def init_params(key):
    """Deterministic init matching nn.Linear shapes: (40->50) then 5x (50->50).

    PyTorch stores weight as (out, in); we store the transpose (in, out)."""
    dims = [(40, 50)] + [(50, 50)] * 5
    params = []
    for i, (fan_in, fan_out) in enumerate(dims):
        kw, kb, key = jax.random.split(jax.random.fold_in(key, i), 3)
        bound = 1.0 / jnp.sqrt(fan_in)
        w = jax.random.uniform(kw, (fan_in, fan_out), jnp.float32, -bound, bound)
        b = jax.random.uniform(kb, (fan_out,), jnp.float32, -bound, bound)
        params.append((w, b))
    return params


def reference_forward(x, params):
    h = x
    for w, b in params:
        h = jax.nn.sigmoid(h @ w + b)
    return h


if __name__ == "__main__":
    key = jax.random.PRNGKey(0)
    params = init_params(key)
    w_stack, b_stack = pack_params(params)   # one-time; off the per-call path

    x = jax.random.normal(jax.random.fold_in(key, 100), (8, 40), jnp.float32)

    out = mlp_forward(x, w_stack, b_stack)
    jax.block_until_ready(out)

    ref = reference_forward(x, params)
    assert out.shape == (8, 50), out.shape
    assert jnp.allclose(out, ref, atol=1e-5, rtol=1e-5), float(
        jnp.max(jnp.abs(out - ref))
    )
    print("KERNEL_OK")
</pallas_src>

<mosaic_0001>
module attributes {stable_mosaic.version = 11 : i64} {
  func.func @_mlp_kernel(%arg0: i32, %arg1: memref<8x128xf32, #tpu.memory_space<vmem>>, %arg2: memref<6x128x128xf32, #tpu.memory_space<vmem>>, %arg3: memref<6x1x128xf32, #tpu.memory_space<vmem>>, %arg4: memref<8x128xf32, #tpu.memory_space<vmem>>) attributes {dimension_semantics = [#tpu.dimension_semantics<parallel>], iteration_bounds = array<i64: 1>, scalar_prefetch = 0 : i64, scratch_operands = 0 : i64, tpu.core_type = #tpu.core_type<tc>, window_params = [{transform_indices = @transform_0, window_bounds = array<i64: 8, 128>}, {pipeline_mode = #tpu.pipeline_mode<synchronous>, transform_indices = @transform_1, window_bounds = array<i64: 6, 128, 128>}, {pipeline_mode = #tpu.pipeline_mode<synchronous>, transform_indices = @transform_2, window_bounds = array<i64: 6, 1, 128>}, {transform_indices = @transform_3, window_bounds = array<i64: 8, 128>}]} {
    %c0 = arith.constant 0 : index
    %c0_0 = arith.constant 0 : index
    %0 = vector.load %arg1[%c0, %c0_0] : memref<8x128xf32, #tpu.memory_space<vmem>>, vector<8x128xf32>
    %c0_1 = arith.constant 0 : index
    %c0_2 = arith.constant 0 : index
    %c0_3 = arith.constant 0 : index
    %1 = vector.load %arg2[%c0_1, %c0_2, %c0_3] : memref<6x128x128xf32, #tpu.memory_space<vmem>>, vector<1x128x128xf32>
    %2 = vector.shape_cast %1 : vector<1x128x128xf32> to vector<128x128xf32>
    %cst = arith.constant dense<0.000000e+00> : vector<8x128xf32>
    %3 = tpu.matmul %0, %2, %cst {dimension_numbers = #tpu.dot_dimension_numbers<[1], [0], [0], [1], [0, 0, 1, 1], [], []>} : vector<8x128xf32>, vector<128x128xf32>, vector<8x128xf32> -> vector<8x128xf32>
    %c0_4 = arith.constant 0 : index
    %c0_5 = arith.constant 0 : index
    %c0_6 = arith.constant 0 : index
    %4 = vector.load %arg3[%c0_4, %c0_5, %c0_6] : memref<6x1x128xf32, #tpu.memory_space<vmem>>, vector<1x1x128xf32>
    %5 = vector.shape_cast %4 : vector<1x1x128xf32> to vector<1x128xf32>
    %6 = vector.broadcast %5 : vector<1x128xf32> to vector<8x128xf32>
    %7 = arith.addf %3, %6 : vector<8x128xf32>
    %8 = math.tanh %7 : vector<8x128xf32>
    %cst_7 = arith.constant 5.000000e-01 : f32
    %9 = vector.broadcast %cst_7 : f32 to vector<8x128xf32>
    %10 = arith.mulf %9, %8 : vector<8x128xf32>
    %cst_8 = arith.constant 5.000000e-01 : f32
    %11 = vector.broadcast %cst_8 : f32 to vector<8x128xf32>
    %12 = arith.addf %10, %11 : vector<8x128xf32>
    %c1 = arith.constant 1 : index
    %c0_9 = arith.constant 0 : index
    %c0_10 = arith.constant 0 : index
    %13 = vector.load %arg2[%c1, %c0_9, %c0_10] : memref<6x128x128xf32, #tpu.memory_space<vmem>>, vector<1x128x128xf32>
    %14 = vector.shape_cast %13 : vector<1x128x128xf32> to vector<128x128xf32>
    %cst_11 = arith.constant dense<0.000000e+00> : vector<8x128xf32>
    %15 = tpu.matmul %12, %14, %cst_11 {dimension_numbers = #tpu.dot_dimension_numbers<[1], [0], [0], [1], [0, 0, 1, 1], [], []>} : vector<8x128xf32>, vector<128x128xf32>, vector<8x128xf32> -> vector<8x128xf32>
    %c1_12 = arith.constant 1 : index
    %c0_13 = arith.constant 0 : index
    %c0_14 = arith.constant 0 : index
    %16 = vector.load %arg3[%c1_12, %c0_13, %c0_14] : memref<6x1x128xf32, #tpu.memory_space<vmem>>, vector<1x1x128xf32>
    %17 = vector.shape_cast %16 : vector<1x1x128xf32> to vector<1x128xf32>
    %18 = vector.broadcast %17 : vector<1x128xf32> to vector<8x128xf32>
    %19 = arith.addf %15, %18 : vector<8x128xf32>
    %20 = math.tanh %19 : vector<8x128xf32>
    %cst_15 = arith.constant 5.000000e-01 : f32
    %21 = vector.broadcast %cst_15 : f32 to vector<8x128xf32>
    %22 = arith.mulf %21, %20 : vector<8x128xf32>
    %cst_16 = arith.constant 5.000000e-01 : f32
    %23 = vector.broadcast %cst_16 : f32 to vector<8x128xf32>
    %24 = arith.addf %22, %23 : vector<8x128xf32>
    %c2 = arith.constant 2 : index
    %c0_17 = arith.constant 0 : index
    %c0_18 = arith.constant 0 : index
    %25 = vector.load %arg2[%c2, %c0_17, %c0_18] : memref<6x128x128xf32, #tpu.memory_space<vmem>>, vector<1x128x128xf32>
    %26 = vector.shape_cast %25 : vector<1x128x128xf32> to vector<128x128xf32>
    %cst_19 = arith.constant dense<0.000000e+00> : vector<8x128xf32>
    %27 = tpu.matmul %24, %26, %cst_19 {dimension_numbers = #tpu.dot_dimension_numbers<[1], [0], [0], [1], [0, 0, 1, 1], [], []>} : vector<8x128xf32>, vector<128x128xf32>, vector<8x128xf32> -> vector<8x128xf32>
    %c2_20 = arith.constant 2 : index
    %c0_21 = arith.constant 0 : index
    %c0_22 = arith.constant 0 : index
    %28 = vector.load %arg3[%c2_20, %c0_21, %c0_22] : memref<6x1x128xf32, #tpu.memory_space<vmem>>, vector<1x1x128xf32>
    %29 = vector.shape_cast %28 : vector<1x1x128xf32> to vector<1x128xf32>
    %30 = vector.broadcast %29 : vector<1x128xf32> to vector<8x128xf32>
    %31 = arith.addf %27, %30 : vector<8x128xf32>
    %32 = math.tanh %31 : vector<8x128xf32>
    %cst_23 = arith.constant 5.000000e-01 : f32
    %33 = vector.broadcast %cst_23 : f32 to vector<8x128xf32>
    %34 = arith.mulf %33, %32 : vector<8x128xf32>
    %cst_24 = arith.constant 5.000000e-01 : f32
    %35 = vector.broadcast %cst_24 : f32 to vector<8x128xf32>
    %36 = arith.addf %34, %35 : vector<8x128xf32>
    %c3 = arith.constant 3 : index
    %c0_25 = arith.constant 0 : index
    %c0_26 = arith.constant 0 : index
    %37 = vector.load %arg2[%c3, %c0_25, %c0_26] : memref<6x128x128xf32, #tpu.memory_space<vmem>>, vector<1x128x128xf32>
    %38 = vector.shape_cast %37 : vector<1x128x128xf32> to vector<128x128xf32>
    %cst_27 = arith.constant dense<0.000000e+00> : vector<8x128xf32>
    %39 = tpu.matmul %36, %38, %cst_27 {dimension_numbers = #tpu.dot_dimension_numbers<[1], [0], [0], [1], [0, 0, 1, 1], [], []>} : vector<8x128xf32>, vector<128x128xf32>, vector<8x128xf32> -> vector<8x128xf32>
    %c3_28 = arith.constant 3 : index
    %c0_29 = arith.constant 0 : index
    %c0_30 = arith.constant 0 : index
    %40 = vector.load %arg3[%c3_28, %c0_29, %c0_30] : memref<6x1x128xf32, #tpu.memory_space<vmem>>, vector<1x1x128xf32>
    %41 = vector.shape_cast %40 : vector<1x1x128xf32> to vector<1x128xf32>
    %42 = vector.broadcast %41 : vector<1x128xf32> to vector<8x128xf32>
    %43 = arith.addf %39, %42 : vector<8x128xf32>
    %44 = math.tanh %43 : vector<8x128xf32>
    %cst_31 = arith.constant 5.000000e-01 : f32
    %45 = vector.broadcast %cst_31 : f32 to vector<8x128xf32>
    %46 = arith.mulf %45, %44 : vector<8x128xf32>
    %cst_32 = arith.constant 5.000000e-01 : f32
    %47 = vector.broadcast %cst_32 : f32 to vector<8x128xf32>
    %48 = arith.addf %46, %47 : vector<8x128xf32>
    %c4 = arith.constant 4 : index
    %c0_33 = arith.constant 0 : index
    %c0_34 = arith.constant 0 : index
    %49 = vector.load %arg2[%c4, %c0_33, %c0_34] : memref<6x128x128xf32, #tpu.memory_space<vmem>>, vector<1x128x128xf32>
    %50 = vector.shape_cast %49 : vector<1x128x128xf32> to vector<128x128xf32>
    %cst_35 = arith.constant dense<0.000000e+00> : vector<8x128xf32>
    %51 = tpu.matmul %48, %50, %cst_35 {dimension_numbers = #tpu.dot_dimension_numbers<[1], [0], [0], [1], [0, 0, 1, 1], [], []>} : vector<8x128xf32>, vector<128x128xf32>, vector<8x128xf32> -> vector<8x128xf32>
    %c4_36 = arith.constant 4 : index
    %c0_37 = arith.constant 0 : index
    %c0_38 = arith.constant 0 : index
    %52 = vector.load %arg3[%c4_36, %c0_37, %c0_38] : memref<6x1x128xf32, #tpu.memory_space<vmem>>, vector<1x1x128xf32>
    %53 = vector.shape_cast %52 : vector<1x1x128xf32> to vector<1x128xf32>
    %54 = vector.broadcast %53 : vector<1x128xf32> to vector<8x128xf32>
    %55 = arith.addf %51, %54 : vector<8x128xf32>
    %56 = math.tanh %55 : vector<8x128xf32>
    %cst_39 = arith.constant 5.000000e-01 : f32
    %57 = vector.broadcast %cst_39 : f32 to vector<8x128xf32>
    %58 = arith.mulf %57, %56 : vector<8x128xf32>
    %cst_40 = arith.constant 5.000000e-01 : f32
    %59 = vector.broadcast %cst_40 : f32 to vector<8x128xf32>
    %60 = arith.addf %58, %59 : vector<8x128xf32>
    %c5 = arith.constant 5 : index
    %c0_41 = arith.constant 0 : index
    %c0_42 = arith.constant 0 : index
    %61 = vector.load %arg2[%c5, %c0_41, %c0_42] : memref<6x128x128xf32, #tpu.memory_space<vmem>>, vector<1x128x128xf32>
    %62 = vector.shape_cast %61 : vector<1x128x128xf32> to vector<128x128xf32>
    %cst_43 = arith.constant dense<0.000000e+00> : vector<8x128xf32>
    %63 = tpu.matmul %60, %62, %cst_43 {dimension_numbers = #tpu.dot_dimension_numbers<[1], [0], [0], [1], [0, 0, 1, 1], [], []>} : vector<8x128xf32>, vector<128x128xf32>, vector<8x128xf32> -> vector<8x128xf32>
    %c5_44 = arith.constant 5 : index
    %c0_45 = arith.constant 0 : index
    %c0_46 = arith.constant 0 : index
    %64 = vector.load %arg3[%c5_44, %c0_45, %c0_46] : memref<6x1x128xf32, #tpu.memory_space<vmem>>, vector<1x1x128xf32>
    %65 = vector.shape_cast %64 : vector<1x1x128xf32> to vector<1x128xf32>
    %66 = vector.broadcast %65 : vector<1x128xf32> to vector<8x128xf32>
    %67 = arith.addf %63, %66 : vector<8x128xf32>
    %68 = math.tanh %67 : vector<8x128xf32>
    %cst_47 = arith.constant 5.000000e-01 : f32
    %69 = vector.broadcast %cst_47 : f32 to vector<8x128xf32>
    %70 = arith.mulf %69, %68 : vector<8x128xf32>
    %cst_48 = arith.constant 5.000000e-01 : f32
    %71 = vector.broadcast %cst_48 : f32 to vector<8x128xf32>
    %72 = arith.addf %70, %71 : vector<8x128xf32>
    %c0_49 = arith.constant 0 : index
    %c0_50 = arith.constant 0 : index
    %73 = vector.load %arg4[%c0_49, %c0_50] : memref<8x128xf32, #tpu.memory_space<vmem>>, vector<8x128xf32>
    tpu.vector_store %arg4[%c0_49, %c0_50], %72 {strides = array<i32>} : memref<8x128xf32, #tpu.memory_space<vmem>>, vector<8x128xf32>,
    return
  }
  func.func @transform_0(%arg0: i32) -> (i32, i32) {
    %c0_i32 = arith.constant 0 : i32
    %c0_i32_0 = arith.constant 0 : i32
    return %arg0, %c0_i32 : i32, i32
  }
  func.func @transform_1(%arg0: i32) -> (i32, i32, i32) {
    %c0_i32 = arith.constant 0 : i32
    %c0_i32_0 = arith.constant 0 : i32
    %c0_i32_1 = arith.constant 0 : i32
    %c0_i32_2 = arith.constant 0 : i32
    return %c0_i32, %c0_i32_0, %c0_i32_1 : i32, i32, i32
  }
  func.func @transform_2(%arg0: i32) -> (i32, i32, i32) {
    %c0_i32 = arith.constant 0 : i32
    %c0_i32_0 = arith.constant 0 : i32
    %c0_i32_1 = arith.constant 0 : i32
    %c0_i32_2 = arith.constant 0 : i32
    return %c0_i32, %c0_i32_0, %c0_i32_1 : i32, i32, i32
  }
  func.func @transform_3(%arg0: i32) -> (i32, i32) {
    %c0_i32 = arith.constant 0 : i32
    %c0_i32_0 = arith.constant 0 : i32
    return %arg0, %c0_i32 : i32, i32
  }
}

</mosaic_0001>

<llo_original>
// kernel: mlp_forward.1
$region0: #{mlp_forward.1}
  #allocation0 [shape = 'u32[]', space=smem, size = 0x4, offset = 0x4, fixed_abs, tag = 'smem constant byte address 0x4 - core index']
  #allocation1 [shape = 'u32[72,128]{1,0:T(1,128)}', space=vmem, size = 0x9000, scoped, tag = 'internal scratch']
  %s0 = inlined_call_operand.vmem [shape: f32[8,128], index: 0, kind: input, shape index: {}]
  %s1 = inlined_call_operand.hbm [shape: f32[6,128,128], index: 1, kind: input, shape index: {}]
  %s2 = inlined_call_operand.vmem [shape: f32[6,1,128], index: 2, kind: input, shape index: {}]
  %s3 = inlined_call_operand.hbm [shape: f32[8,128], index: 3, kind: output, shape index: {}]
  %s4 = sld [smem:[#allocation0]]
  $region26: #{mlp_forward.1} parent=0
    _
  %s6 = ssub.s32 1, %s4
  %s7 = scalar_select 0, %s6, %s4
  $region1: #{mlp_forward.1} parent=0
    #allocation2 [shape = 'u8[393216]{0}', space=vmem, size = 0x60000, scoped, tag = 'input window, operand 1, single buffered']
    #allocation3 [shape = 's32[1]{0}', space=sflag, size = 0x4, scoped, tag = 'scoped memory for mlp_forward.1']
    #allocation4 [shape = 's32[1]{0}', space=sflag, size = 0x4, scoped, tag = 'scoped memory for mlp_forward.1']
    #allocation5 [shape = 'u8[4096]{0}', space=vmem, size = 0x1000, scoped, tag = 'output window, operand 0, single buffered']
    %8 = vsyncpa [#allocation3], 0
    %9 = vsyncpa [#allocation4], 0
    // Predicated region
    $region2: #{mlp_forward.1} parent=1 // pred_check
      _
    $region3: #{mlp_forward.1} parent=1 // pred_check_branch
      %11 = sbr.rel (0) target = $region5
    $region4: #{mlp_forward.1} parent=1 // pred_region
      _
    $region5: #{mlp_forward.1} parent=1 // pred_fallthru
      _
    // Predicated region
    $region6: #{mlp_forward.1} parent=1 // pred_check
      _
    $region7: #{mlp_forward.1} parent=1 // pred_check_branch
      %13 = sbr.rel (0) target = $region9
    $region8: #{mlp_forward.1} parent=1 // pred_region
      %15 = vsyncadd [#allocation3], 0
      %s16 = sshll.u32 %s1, 4
      %s17 = int_to_ptr.hbm [resolvable:$true] %s16
      %s18 = sshll.u32 [#allocation2], 4
      %s19 = int_to_ptr.vmem [resolvable:$true] %s18
      %24 = dma.hbm_to_vmem [thread:$0]  %s17, 12288, %s19, [#allocation3], 128, 128, 8
    $region9: #{mlp_forward.1} parent=1 // pred_fallthru
      _
    // Predicated region
    $region10: #{mlp_forward.1} parent=1 // pred_check
      _
    $region11: #{mlp_forward.1} parent=1 // pred_check_branch
      %26 = sbr.rel (0) target = $region13
    $region12: #{mlp_forward.1} parent=1 // pred_region
      _
    $region13: #{mlp_forward.1} parent=1 // pred_fallthru
      _
    // Predicated region
    $region14: #{mlp_forward.1} parent=1 // pred_check
      _
    $region15: #{mlp_forward.1} parent=1 // pred_check_branch
      %28 = sbr.rel (0) target = $region17
    $region16: #{mlp_forward.1} parent=1 // pred_region
      %30 = dma.done [#allocation3], 12288
    $region17: #{mlp_forward.1} parent=1 // pred_fallthru
      _
    %v31 = vld [vmem:[%s0] sm:$0xff]
    %v32 = vld [vmem:[#allocation2] sm:$0xff]
    %v33 = vld [vmem:[#allocation2 + $0x8] sm:$0xff]
    %v34 = vld [vmem:[#allocation2 + $0x10] sm:$0xff]
    %v35 = vld [vmem:[#allocation2 + $0x18] sm:$0xff]
    %v36 = vld [vmem:[#allocation2 + $0x20] sm:$0xff]
    %v37 = vld [vmem:[#allocation2 + $0x28] sm:$0xff]
    %v38 = vld [vmem:[#allocation2 + $0x30] sm:$0xff]
    %v39 = vld [vmem:[#allocation2 + $0x38] sm:$0xff]
    %v40 = vld [vmem:[#allocation2 + $0x40] sm:$0xff]
    %v41 = vld [vmem:[#allocation2 + $0x48] sm:$0xff]
    %v42 = vld [vmem:[#allocation2 + $0x50] sm:$0xff]
    %v43 = vld [vmem:[#allocation2 + $0x58] sm:$0xff]
    %v44 = vld [vmem:[#allocation2 + $0x60] sm:$0xff]
    %v45 = vld [vmem:[#allocation2 + $0x68] sm:$0xff]
    %v46 = vld [vmem:[#allocation2 + $0x70] sm:$0xff]
    %v47 = vld [vmem:[#allocation2 + $0x78] sm:$0xff]
    %v48 = vld [vmem:[%s2] sm:$0x1]
    %v50 = vperm.slane %v48, 0
    %52 = vmatpush.msra.mxu0 %v47
    %53 = vmatpush.msra.mxu0 %v46
    %54 = vmatpush.msra.mxu0 %v45
    %55 = vmatpush.msra.mxu0 %v44
    %56 = vmatpush.msra.mxu0 %v43
    %57 = vmatpush.msra.mxu0 %v42
    %58 = vmatpush.msra.mxu0 %v41
    %59 = vmatpush.msra.mxu0 %v40
    %60 = vmatpush.msra.mxu0 %v39
    %61 = vmatpush.msra.mxu0 %v38
    %62 = vmatpush.msra.mxu0 %v37
    %63 = vmatpush.msra.mxu0 %v36
    %64 = vmatpush.msra.mxu0 %v35
    %65 = vmatpush.msra.mxu0 %v34
    %66 = vmatpush.msra.mxu0 %v33
    %67 = vmatpush.msra.mxu0 %v32
    %68 = vmatmul.f32.gmra.mxu0 %v31
    %v69 = vpop.f32.mrf.mxu0
    %v70 = vadd.f32 %v50, %v69
    %71 = vdwg.mxu0
    %v72 = vtanh.pop %v70
    %v73 = vmul.f32 %v72, 0.5
    %v74 = vadd.f32 %v73, 0.5
    %s75 = scalar_lea.vmem [#allocation2], 128
    %v76 = vld [vmem:[%s75] sm:$0xff]
    %v77 = vld [vmem:[%s75 + $0x8] sm:$0xff]
    %v78 = vld [vmem:[%s75 + $0x10] sm:$0xff]
    %v79 = vld [vmem:[%s75 + $0x18] sm:$0xff]
    %v80 = vld [vmem:[%s75 + $0x20] sm:$0xff]
    %v81 = vld [vmem:[%s75 + $0x28] sm:$0xff]
    %v82 = vld [vmem:[%s75 + $0x30] sm:$0xff]
    %v83 = vld [vmem:[%s75 + $0x38] sm:$0xff]
    %v84 = vld [vmem:[%s75 + $0x40] sm:$0xff]
    %v85 = vld [vmem:[%s75 + $0x48] sm:$0xff]
    %v86 = vld [vmem:[%s75 + $0x50] sm:$0xff]
    %v87 = vld [vmem:[%s75 + $0x58] sm:$0xff]
    %v88 = vld [vmem:[%s75 + $0x60] sm:$0xff]
    %v89 = vld [vmem:[%s75 + $0x68] sm:$0xff]
    %v90 = vld [vmem:[%s75 + $0x70] sm:$0xff]
    %v91 = vld [vmem:[%s75 + $0x78] sm:$0xff]
    %s92 = scalar_lea.vmem %s2, 1
    %v93 = vld [vmem:[%s92] sm:$0x1]
    %v95 = vperm.slane %v93, 0
    %97 = vmatpush.msra.mxu0 %v91
    %98 = vmatpush.msra.mxu0 %v90
    %99 = vmatpush.msra.mxu0 %v89
    %100 = vmatpush.msra.mxu0 %v88
    %101 = vmatpush.msra.mxu0 %v87
    %102 = vmatpush.msra.mxu0 %v86
    %103 = vmatpush.msra.mxu0 %v85
    %104 = vmatpush.msra.mxu0 %v84
    %105 = vmatpush.msra.mxu0 %v83
    %106 = vmatpush.msra.mxu0 %v82
    %107 = vmatpush.msra.mxu0 %v81
    %108 = vmatpush.msra.mxu0 %v80
    %109 = vmatpush.msra.mxu0 %v79
    %110 = vmatpush.msra.mxu0 %v78
    %111 = vmatpush.msra.mxu0 %v77
    %112 = vmatpush.msra.mxu0 %v76
    %113 = vmatmul.f32.gmra.mxu0 %v74
    %v114 = vpop.f32.mrf.mxu0
    %v115 = vadd.f32 %v95, %v114
    %116 = vdwg.mxu0
    %v117 = vtanh.pop %v115
    %v118 = vmul.f32 %v117, 0.5
    %v119 = vadd.f32 %v118, 0.5
    %s120 = scalar_lea.vmem [#allocation2], 256
    %v121 = vld [vmem:[%s120] sm:$0xff]
    %v122 = vld [vmem:[%s120 + $0x8] sm:$0xff]
    %v123 = vld [vmem:[%s120 + $0x10] sm:$0xff]
    %v124 = vld [vmem:[%s120 + $0x18] sm:$0xff]
    %v125 = vld [vmem:[%s120 + $0x20] sm:$0xff]
    %v126 = vld [vmem:[%s120 + $0x28] sm:$0xff]
    %v127 = vld [vmem:[%s120 + $0x30] sm:$0xff]
    %v128 = vld [vmem:[%s120 + $0x38] sm:$0xff]
    %v129 = vld [vmem:[%s120 + $0x40] sm:$0xff]
    %v130 = vld [vmem:[%s120 + $0x48] sm:$0xff]
    %v131 = vld [vmem:[%s120 + $0x50] sm:$0xff]
    %v132 = vld [vmem:[%s120 + $0x58] sm:$0xff]
    %v133 = vld [vmem:[%s120 + $0x60] sm:$0xff]
    %v134 = vld [vmem:[%s120 + $0x68] sm:$0xff]
    %v135 = vld [vmem:[%s120 + $0x70] sm:$0xff]
    %v136 = vld [vmem:[%s120 + $0x78] sm:$0xff]
    %s137 = scalar_lea.vmem %s2, 2
    %v138 = vld [vmem:[%s137] sm:$0x1]
    %v140 = vperm.slane %v138, 0
    %142 = vmatpush.msra.mxu0 %v136
    %143 = vmatpush.msra.mxu0 %v135
    %144 = vmatpush.msra.mxu0 %v134
    %145 = vmatpush.msra.mxu0 %v133
    %146 = vmatpush.msra.mxu0 %v132
    %147 = vmatpush.msra.mxu0 %v131
    %148 = vmatpush.msra.mxu0 %v130
    %149 = vmatpush.msra.mxu0 %v129
    %150 = vmatpush.msra.mxu0 %v128
    %151 = vmatpush.msra.mxu0 %v127
    %152 = vmatpush.msra.mxu0 %v126
    %153 = vmatpush.msra.mxu0 %v125
    %154 = vmatpush.msra.mxu0 %v124
    %155 = vmatpush.msra.mxu0 %v123
    %156 = vmatpush.msra.mxu0 %v122
    %157 = vmatpush.msra.mxu0 %v121
    %158 = vmatmul.f32.gmra.mxu0 %v119
    %v159 = vpop.f32.mrf.mxu0
    %v160 = vadd.f32 %v140, %v159
    %161 = vdwg.mxu0
    %v162 = vtanh.pop %v160
    %v163 = vmul.f32 %v162, 0.5
    %v164 = vadd.f32 %v163, 0.5
    %s165 = scalar_lea.vmem [#allocation2], 384
    %v166 = vld [vmem:[%s165] sm:$0xff]
    %v167 = vld [vmem:[%s165 + $0x8] sm:$0xff]
    %v168 = vld [vmem:[%s165 + $0x10] sm:$0xff]
    %v169 = vld [vmem:[%s165 + $0x18] sm:$0xff]
    %v170 = vld [vmem:[%s165 + $0x20] sm:$0xff]
    %v171 = vld [vmem:[%s165 + $0x28] sm:$0xff]
    %v172 = vld [vmem:[%s165 + $0x30] sm:$0xff]
    %v173 = vld [vmem:[%s165 + $0x38] sm:$0xff]
    %v174 = vld [vmem:[%s165 + $0x40] sm:$0xff]
    %v175 = vld [vmem:[%s165 + $0x48] sm:$0xff]
    %v176 = vld [vmem:[%s165 + $0x50] sm:$0xff]
    %v177 = vld [vmem:[%s165 + $0x58] sm:$0xff]
    %v178 = vld [vmem:[%s165 + $0x60] sm:$0xff]
    %v179 = vld [vmem:[%s165 + $0x68] sm:$0xff]
    %v180 = vld [vmem:[%s165 + $0x70] sm:$0xff]
    %v181 = vld [vmem:[%s165 + $0x78] sm:$0xff]
    %s182 = scalar_lea.vmem %s2, 3
    %v183 = vld [vmem:[%s182] sm:$0x1]
    %v185 = vperm.slane %v183, 0
    %187 = vmatpush.msra.mxu0 %v181
    %188 = vmatpush.msra.mxu0 %v180
    %189 = vmatpush.msra.mxu0 %v179
    %190 = vmatpush.msra.mxu0 %v178
    %191 = vmatpush.msra.mxu0 %v177
    %192 = vmatpush.msra.mxu0 %v176
    %193 = vmatpush.msra.mxu0 %v175
    %194 = vmatpush.msra.mxu0 %v174
    %195 = vmatpush.msra.mxu0 %v173
    %196 = vmatpush.msra.mxu0 %v172
    %197 = vmatpush.msra.mxu0 %v171
    %198 = vmatpush.msra.mxu0 %v170
    %199 = vmatpush.msra.mxu0 %v169
    %200 = vmatpush.msra.mxu0 %v168
    %201 = vmatpush.msra.mxu0 %v167
    %202 = vmatpush.msra.mxu0 %v166
    %203 = vmatmul.f32.gmra.mxu0 %v164
    %v204 = vpop.f32.mrf.mxu0
    %v205 = vadd.f32 %v185, %v204
    %206 = vdwg.mxu0
    %v207 = vtanh.pop %v205
    %v208 = vmul.f32 %v207, 0.5
    %v209 = vadd.f32 %v208, 0.5
    %s210 = scalar_lea.vmem [#allocation2], 512
    %v211 = vld [vmem:[%s210] sm:$0xff]
    %v212 = vld [vmem:[%s210 + $0x8] sm:$0xff]
    %v213 = vld [vmem:[%s210 + $0x10] sm:$0xff]
    %v214 = vld [vmem:[%s210 + $0x18] sm:$0xff]
    %v215 = vld [vmem:[%s210 + $0x20] sm:$0xff]
    %v216 = vld [vmem:[%s210 + $0x28] sm:$0xff]
    %v217 = vld [vmem:[%s210 + $0x30] sm:$0xff]
    %v218 = vld [vmem:[%s210 + $0x38] sm:$0xff]
    %v219 = vld [vmem:[%s210 + $0x40] sm:$0xff]
    %v220 = vld [vmem:[%s210 + $0x48] sm:$0xff]
    %v221 = vld [vmem:[%s210 + $0x50] sm:$0xff]
    %v222 = vld [vmem:[%s210 + $0x58] sm:$0xff]
    %v223 = vld [vmem:[%s210 + $0x60] sm:$0xff]
    %v224 = vld [vmem:[%s210 + $0x68] sm:$0xff]
    %v225 = vld [vmem:[%s210 + $0x70] sm:$0xff]
    %v226 = vld [vmem:[%s210 + $0x78] sm:$0xff]
    %s227 = scalar_lea.vmem %s2, 4
    %v228 = vld [vmem:[%s227] sm:$0x1]
    %v230 = vperm.slane %v228, 0
    %232 = vmatpush.msra.mxu0 %v226
    %233 = vmatpush.msra.mxu0 %v225
    %234 = vmatpush.msra.mxu0 %v224
    %235 = vmatpush.msra.mxu0 %v223
    %236 = vmatpush.msra.mxu0 %v222
    %237 = vmatpush.msra.mxu0 %v221
    %238 = vmatpush.msra.mxu0 %v220
    %239 = vmatpush.msra.mxu0 %v219
    %240 = vmatpush.msra.mxu0 %v218
    %241 = vmatpush.msra.mxu0 %v217
    %242 = vmatpush.msra.mxu0 %v216
    %243 = vmatpush.msra.mxu0 %v215
    %244 = vmatpush.msra.mxu0 %v214
    %245 = vmatpush.msra.mxu0 %v213
    %246 = vmatpush.msra.mxu0 %v212
    %247 = vmatpush.msra.mxu0 %v211
    %248 = vmatmul.f32.gmra.mxu0 %v209
    %v249 = vpop.f32.mrf.mxu0
    %v250 = vadd.f32 %v230, %v249
    %251 = vdwg.mxu0
    %v252 = vtanh.pop %v250
    %v253 = vmul.f32 %v252, 0.5
    %v254 = vadd.f32 %v253, 0.5
    %s255 = scalar_lea.vmem [#allocation2], 640
    %v256 = vld [vmem:[%s255] sm:$0xff]
    %v257 = vld [vmem:[%s255 + $0x8] sm:$0xff]
    %v258 = vld [vmem:[%s255 + $0x10] sm:$0xff]
    %v259 = vld [vmem:[%s255 + $0x18] sm:$0xff]
    %v260 = vld [vmem:[%s255 + $0x20] sm:$0xff]
    %v261 = vld [vmem:[%s255 + $0x28] sm:$0xff]
    %v262 = vld [vmem:[%s255 + $0x30] sm:$0xff]
    %v263 = vld [vmem:[%s255 + $0x38] sm:$0xff]
    %v264 = vld [vmem:[%s255 + $0x40] sm:$0xff]
    %v265 = vld [vmem:[%s255 + $0x48] sm:$0xff]
    %v266 = vld [vmem:[%s255 + $0x50] sm:$0xff]
    %v267 = vld [vmem:[%s255 + $0x58] sm:$0xff]
    %v268 = vld [vmem:[%s255 + $0x60] sm:$0xff]
    %v269 = vld [vmem:[%s255 + $0x68] sm:$0xff]
    %v270 = vld [vmem:[%s255 + $0x70] sm:$0xff]
    %v271 = vld [vmem:[%s255 + $0x78] sm:$0xff]
    %s272 = scalar_lea.vmem %s2, 5
    %v273 = vld [vmem:[%s272] sm:$0x1]
    %v275 = vperm.slane %v273, 0
    %277 = vmatpush.msra.mxu0 %v271
    %278 = vmatpush.msra.mxu0 %v270
    %279 = vmatpush.msra.mxu0 %v269
    %280 = vmatpush.msra.mxu0 %v268
    %281 = vmatpush.msra.mxu0 %v267
    %282 = vmatpush.msra.mxu0 %v266
    %283 = vmatpush.msra.mxu0 %v265
    %284 = vmatpush.msra.mxu0 %v264
    %285 = vmatpush.msra.mxu0 %v263
    %286 = vmatpush.msra.mxu0 %v262
    %287 = vmatpush.msra.mxu0 %v261
    %288 = vmatpush.msra.mxu0 %v260
    %289 = vmatpush.msra.mxu0 %v259
    %290 = vmatpush.msra.mxu0 %v258
    %291 = vmatpush.msra.mxu0 %v257
    %292 = vmatpush.msra.mxu0 %v256
    %293 = vmatmul.f32.gmra.mxu0 %v254
    %v294 = vpop.f32.mrf.mxu0
    %v295 = vadd.f32 %v275, %v294
    %296 = vdwg.mxu0
    %v297 = vtanh.pop %v295
    %v298 = vmul.f32 %v297, 0.5
    %v299 = vadd.f32 %v298, 0.5
    %300 = vst [vmem:[#allocation5] sm:$0xff] %v299
    // Predicated region
    $region18: #{mlp_forward.1} parent=1 // pred_check
      _
    $region19: #{mlp_forward.1} parent=1 // pred_check_branch
      %302 = sbr.rel (0) target = $region21
    $region20: #{mlp_forward.1} parent=1 // pred_region
      %304 = vsyncadd [#allocation4], 0
      %s306 = sshll.u32 [#allocation5], 4
      %s307 = int_to_ptr.vmem [resolvable:$true] %s306
      %s308 = sshll.u32 %s3, 4
      %s309 = int_to_ptr.hbm [resolvable:$true] %s308
      %311 = dma.vmem_to_hbm [thread:$0]  %s307, 128, %s309, [#allocation4]
    $region21: #{mlp_forward.1} parent=1 // pred_fallthru
      _
    // Predicated region
    $region22: #{mlp_forward.1} parent=1 // pred_check
      _
    $region23: #{mlp_forward.1} parent=1 // pred_check_branch
      %313 = sbr.rel (0) target = $region25
    $region24: #{mlp_forward.1} parent=1 // pred_region
      %315 = dma.done [#allocation4], 128
    $region25: #{mlp_forward.1} parent=1 // pred_fallthru
      _
    %316 = vsyncpa [#allocation3], 1
    %317 = vsyncpa [#allocation4], 1

</llo_original>
